<compile_context>
chip_gen: v7x
topology: tpu7x:2x2x1
jax: 0.10.0
libtpu: 0.0.40
codegen_flags: <defaults>
</compile_context>

<pallas_src>
import functools

import jax
import jax.numpy as jnp
from jax.experimental import pallas as pl
from jax.experimental.pallas import tpu as pltpu


def _round_up(x, m):
    return (x + m - 1) // m * m


@functools.lru_cache(maxsize=None)
def _vmem_budget_bytes():
    """Generation-aware VMEM budget for the double-buffered working set."""
    try:
        cap = int(getattr(pltpu.get_tpu_info(), "vmem_capacity_bytes",
                          128 << 20))
    except Exception:  # fallback if hw query is unavailable
        cap = 128 << 20
    # <= half of physical VMEM, capped at 48 MiB so a tiling that is fine on
    # v5e/v6e (128 MiB physical) does not overshoot v7x's 64 MiB per core.
    return int(min(cap // 2, 48 << 20))


def _choose_row_tile(batch, k, n, n_streams, x_itemsize, w_itemsize, budget):
    """Largest sublane-aligned row tile whose double-buffered working set fits
    the VMEM budget.  No artificial 512 cap: with K/N in the tens the tiles
    are tiny, so fewer grid steps (less fixed per-step overhead) wins."""
    tm = _round_up(batch, 8)

    def footprint(t):
        params = 2 * (k * n * w_itemsize + n * 4)                # weight + bias
        per_stream = 2 * t * (k * x_itemsize + n * x_itemsize)   # x + out tiles
        return params + n_streams * per_stream

    while tm > 8 and footprint(tm) > budget:
        tm = max(8, (tm // 2 // 8) * 8)
    return tm


def _linear_sigmoid_kernel(*refs, mm_dtype, n_streams):
    # refs = (x_0..x_{S-1}, w, b, o_0..o_{S-1})
    x_refs = refs[:n_streams]
    w_ref, b_ref = refs[n_streams], refs[n_streams + 1]
    o_refs = refs[n_streams + 2:]
    w = w_ref[...]            # [K, N], already in matmul dtype (resident)
    b = b_ref[...]            # [1, N], f32 (resident)
    for x_ref, o_ref in zip(x_refs, o_refs):
        # dtype cast happens inside the kernel (no extra HBM pre-pass);
        # accumulation / bias add / sigmoid stay in f32.
        acc = jnp.dot(x_ref[...].astype(mm_dtype), w,
                      preferred_element_type=jnp.float32)
        o_ref[...] = jax.nn.sigmoid(acc + b).astype(o_ref.dtype)


def _linear_sigmoid(xs, w_mm, b2d, mm_dtype):
    """sigmoid(x @ w + b) for one or two activation streams in ONE pallas_call.

    xs:   tuple of [B, K] activation matrices (no stacking / no pre-cast)
    w_mm: [K, N] weight already stored in the matmul dtype
    b2d:  [1, N] f32 bias
    returns list of [B, N] arrays (one per stream)
    """
    n_streams = len(xs)
    B, K = xs[0].shape
    N = w_mm.shape[1]
    out_dtype = xs[0].dtype

    budget = _vmem_budget_bytes()
    tm = _choose_row_tile(B, K, N, n_streams,
                          jnp.dtype(out_dtype).itemsize,
                          jnp.dtype(w_mm.dtype).itemsize, budget)
    grid = (pl.cdiv(B, tm),)  # partial last tile handled by Pallas masking

    x_spec = pl.BlockSpec((tm, K), lambda i: (i, 0))
    in_specs = ([x_spec] * n_streams
                + [pl.BlockSpec((K, N), lambda i: (0, 0)),   # resident weight
                   pl.BlockSpec((1, N), lambda i: (0, 0))])  # resident bias
    out_spec = pl.BlockSpec((tm, N), lambda i: (i, 0))

    kernel = functools.partial(_linear_sigmoid_kernel,
                               mm_dtype=mm_dtype, n_streams=n_streams)

    # TODO(synk): add a K-axis grid ("arbitrary", last) with an f32 VMEM
    # accumulator only if orig_num_classes grows into the thousands; for K in
    # the tens it would just add per-step overhead.
    outs = pl.pallas_call(
        kernel,
        out_shape=[jax.ShapeDtypeStruct((B, N), out_dtype)
                   for _ in range(n_streams)],
        grid=grid,
        in_specs=in_specs,
        out_specs=[out_spec] * n_streams,
        compiler_params=pltpu.CompilerParams(
            # Row-tile axis is the parallel axis: on v7x both TensorCores get
            # fine-grained row-tile work; no-op on single-TC v5e/v6e.
            dimension_semantics=("parallel",),
            vmem_limit_bytes=budget),
    )(*xs, w_mm, b2d)
    return outs


@functools.partial(jax.jit, static_argnames=("mm_dtype",))
def _forward_pair(logits, logits_aux, w_mm, b2d, *, mm_dtype):
    o = _linear_sigmoid((logits, logits_aux), w_mm, b2d, mm_dtype)
    return o[0], o[1]


@functools.partial(jax.jit, static_argnames=("mm_dtype",))
def _forward_single(logits, w_mm, b2d, *, mm_dtype):
    return _linear_sigmoid((logits,), w_mm, b2d, mm_dtype)[0]


class NetworkExtensionPallas:
    """JAX/Pallas equivalent of the PyTorch NetworkExtension module.

    matmul_dtype=jnp.bfloat16 halves the activation/weight read bytes (the op
    is HBM-bound); the MXU is bf16-native on v5e, v6e and v7x alike.
    Accumulation, bias add and sigmoid always stay in f32 inside the kernel.
    """

    def __init__(self, orig_num_classes, num_classes, auxiliary, key,
                 matmul_dtype=jnp.float32):
        self._auxiliary = auxiliary
        self.training = True
        self.num_classes = num_classes
        self.matmul_dtype = jnp.dtype(matmul_dtype)
        k_w, k_b = jax.random.split(key)
        # nn.Linear default init: U(-1/sqrt(fan_in), 1/sqrt(fan_in))
        bound = 1.0 / (orig_num_classes ** 0.5)
        # Weight stored transposed: [orig_num_classes, num_classes].
        self.weight_t = jax.random.uniform(
            k_w, (orig_num_classes, num_classes), jnp.float32, -bound, bound)
        self.bias = jax.random.uniform(
            k_b, (num_classes,), jnp.float32, -bound, bound)
        # Matmul-dtype weight cast + 2-D bias hoisted out of the call path.
        self.w_mm = self.weight_t.astype(self.matmul_dtype)
        self.b2d = self.bias.reshape(1, num_classes)
        # TODO(synk): if orig_num_classes is ever not a multiple of 8 (f32) /
        # 16 (bf16), pad K where the activations are produced so x/weight
        # tiles are fully sublane-aligned; blocks currently use the full K.

    def __call__(self, logits_logits_aux):
        logits, logits_aux = logits_logits_aux[0], logits_logits_aux[1]
        if self._auxiliary and self.training:
            # Single fused pallas_call for both activation streams.
            logits, logits_aux = _forward_pair(
                logits, logits_aux, self.w_mm, self.b2d,
                mm_dtype=self.matmul_dtype)
            return (logits, logits_aux)
        logits = _forward_single(logits, self.w_mm, self.b2d,
                                 mm_dtype=self.matmul_dtype)
        return (logits, logits_aux)


if __name__ == "__main__":
    key = jax.random.PRNGKey(0)
    k_mod, k_x, k_aux = jax.random.split(key, 3)

    batch = 8
    orig_num_classes = 32
    num_classes = 16

    model = NetworkExtensionPallas(orig_num_classes, num_classes,
                                   auxiliary=True, key=k_mod)

    logits_in = jax.random.normal(k_x, (batch, orig_num_classes), jnp.float32)
    logits_aux_in = jax.random.normal(k_aux, (batch, orig_num_classes),
                                      jnp.float32)

    # Training path (auxiliary head active): one fused kernel, two outputs.
    out_logits, out_logits_aux = model((logits_in, logits_aux_in))
    jax.block_until_ready(out_logits)
    jax.block_until_ready(out_logits_aux)

    # Reference check in plain JAX.
    ref = jax.nn.sigmoid(logits_in @ model.weight_t + model.bias)
    ref_aux = jax.nn.sigmoid(logits_aux_in @ model.weight_t + model.bias)
    assert out_logits.shape == (batch, num_classes)
    assert out_logits_aux.shape == (batch, num_classes)
    assert jnp.allclose(out_logits, ref, atol=1e-5)
    assert jnp.allclose(out_logits_aux, ref_aux, atol=1e-5)

    # Eval path: aux logits pass through untouched.
    model.training = False
    out_eval, aux_eval = model((logits_in, logits_aux_in))
    jax.block_until_ready(out_eval)
    assert jnp.allclose(out_eval, ref, atol=1e-5)
    assert jnp.allclose(aux_eval, logits_aux_in)

    # bf16 matmul-input path (HBM-traffic halving on v5e/v6e/v7x): looser tol.
    model_bf16 = NetworkExtensionPallas(orig_num_classes, num_classes,
                                        auxiliary=True, key=k_mod,
                                        matmul_dtype=jnp.bfloat16)
    out_bf16, out_bf16_aux = model_bf16((logits_in, logits_aux_in))
    jax.block_until_ready(out_bf16)
    assert jnp.allclose(out_bf16, ref, atol=2e-2)
    assert jnp.allclose(out_bf16_aux, ref_aux, atol=2e-2)

    print("KERNEL_OK")
</pallas_src>

<mosaic_0001>
module attributes {stable_mosaic.version = 11 : i64} {
  func.func @_linear_sigmoid_kernel(%arg0: i32, %arg1: memref<8x32xf32, #tpu.memory_space<vmem>>, %arg2: memref<8x32xf32, #tpu.memory_space<vmem>>, %arg3: memref<32x16xf32, #tpu.memory_space<vmem>>, %arg4: memref<1x16xf32, #tpu.memory_space<vmem>>, %arg5: memref<8x16xf32, #tpu.memory_space<vmem>>, %arg6: memref<8x16xf32, #tpu.memory_space<vmem>>) attributes {dimension_semantics = [#tpu.dimension_semantics<parallel>], iteration_bounds = array<i64: 1>, scalar_prefetch = 0 : i64, scratch_operands = 0 : i64, tpu.core_type = #tpu.core_type<tc>, window_params = [{transform_indices = @transform_0, window_bounds = array<i64: 8, 32>}, {transform_indices = @transform_1, window_bounds = array<i64: 8, 32>}, {pipeline_mode = #tpu.pipeline_mode<synchronous>, transform_indices = @transform_2, window_bounds = array<i64: 32, 16>}, {pipeline_mode = #tpu.pipeline_mode<synchronous>, transform_indices = @transform_3, window_bounds = array<i64: 1, 16>}, {transform_indices = @transform_4, window_bounds = array<i64: 8, 16>}, {transform_indices = @transform_5, window_bounds = array<i64: 8, 16>}]} {
    %c0 = arith.constant 0 : index
    %c0_0 = arith.constant 0 : index
    %0 = vector.load %arg3[%c0, %c0_0] : memref<32x16xf32, #tpu.memory_space<vmem>>, vector<32x16xf32>
    %c0_1 = arith.constant 0 : index
    %c0_2 = arith.constant 0 : index
    %1 = vector.load %arg4[%c0_1, %c0_2] : memref<1x16xf32, #tpu.memory_space<vmem>>, vector<1x16xf32>
    %c0_3 = arith.constant 0 : index
    %c0_4 = arith.constant 0 : index
    %2 = vector.load %arg1[%c0_3, %c0_4] : memref<8x32xf32, #tpu.memory_space<vmem>>, vector<8x32xf32>
    %cst = arith.constant dense<0.000000e+00> : vector<8x16xf32>
    %3 = tpu.matmul %2, %0, %cst {dimension_numbers = #tpu.dot_dimension_numbers<[1], [0], [0], [1], [0, 0, 1, 1], [], []>} : vector<8x32xf32>, vector<32x16xf32>, vector<8x16xf32> -> vector<8x16xf32>
    %4 = vector.broadcast %1 : vector<1x16xf32> to vector<8x16xf32>
    %5 = arith.addf %3, %4 : vector<8x16xf32>
    %6 = arith.negf %5 : vector<8x16xf32>
    %7 = math.exp %6 : vector<8x16xf32>
    %cst_5 = arith.constant 1.000000e+00 : f32
    %8 = vector.broadcast %cst_5 : f32 to vector<8x16xf32>
    %9 = arith.addf %8, %7 : vector<8x16xf32>
    %10 = arith.divf %8, %9 : vector<8x16xf32>
    %c0_6 = arith.constant 0 : index
    %c0_7 = arith.constant 0 : index
    %11 = vector.load %arg5[%c0_6, %c0_7] : memref<8x16xf32, #tpu.memory_space<vmem>>, vector<8x16xf32>
    tpu.vector_store %arg5[%c0_6, %c0_7], %10 {strides = array<i32>} : memref<8x16xf32, #tpu.memory_space<vmem>>, vector<8x16xf32>,
    %c0_8 = arith.constant 0 : index
    %c0_9 = arith.constant 0 : index
    %12 = vector.load %arg2[%c0_8, %c0_9] : memref<8x32xf32, #tpu.memory_space<vmem>>, vector<8x32xf32>
    %cst_10 = arith.constant dense<0.000000e+00> : vector<8x16xf32>
    %13 = tpu.matmul %12, %0, %cst_10 {dimension_numbers = #tpu.dot_dimension_numbers<[1], [0], [0], [1], [0, 0, 1, 1], [], []>} : vector<8x32xf32>, vector<32x16xf32>, vector<8x16xf32> -> vector<8x16xf32>
    %14 = vector.broadcast %1 : vector<1x16xf32> to vector<8x16xf32>
    %15 = arith.addf %13, %14 : vector<8x16xf32>
    %16 = arith.negf %15 : vector<8x16xf32>
    %17 = math.exp %16 : vector<8x16xf32>
    %cst_11 = arith.constant 1.000000e+00 : f32
    %18 = vector.broadcast %cst_11 : f32 to vector<8x16xf32>
    %19 = arith.addf %18, %17 : vector<8x16xf32>
    %20 = arith.divf %18, %19 : vector<8x16xf32>
    %c0_12 = arith.constant 0 : index
    %c0_13 = arith.constant 0 : index
    %21 = vector.load %arg6[%c0_12, %c0_13] : memref<8x16xf32, #tpu.memory_space<vmem>>, vector<8x16xf32>
    tpu.vector_store %arg6[%c0_12, %c0_13], %20 {strides = array<i32>} : memref<8x16xf32, #tpu.memory_space<vmem>>, vector<8x16xf32>,
    return
  }
  func.func @transform_0(%arg0: i32) -> (i32, i32) {
    %c0_i32 = arith.constant 0 : i32
    %c0_i32_0 = arith.constant 0 : i32
    return %arg0, %c0_i32 : i32, i32
  }
  func.func @transform_1(%arg0: i32) -> (i32, i32) {
    %c0_i32 = arith.constant 0 : i32
    %c0_i32_0 = arith.constant 0 : i32
    return %arg0, %c0_i32 : i32, i32
  }
  func.func @transform_2(%arg0: i32) -> (i32, i32) {
    %c0_i32 = arith.constant 0 : i32
    %c0_i32_0 = arith.constant 0 : i32
    %c0_i32_1 = arith.constant 0 : i32
    return %c0_i32, %c0_i32_0 : i32, i32
  }
  func.func @transform_3(%arg0: i32) -> (i32, i32) {
    %c0_i32 = arith.constant 0 : i32
    %c0_i32_0 = arith.constant 0 : i32
    %c0_i32_1 = arith.constant 0 : i32
    return %c0_i32, %c0_i32_0 : i32, i32
  }
  func.func @transform_4(%arg0: i32) -> (i32, i32) {
    %c0_i32 = arith.constant 0 : i32
    %c0_i32_0 = arith.constant 0 : i32
    return %arg0, %c0_i32 : i32, i32
  }
  func.func @transform_5(%arg0: i32) -> (i32, i32) {
    %c0_i32 = arith.constant 0 : i32
    %c0_i32_0 = arith.constant 0 : i32
    return %arg0, %c0_i32 : i32, i32
  }
}

</mosaic_0001>

<llo_original>
// kernel: _forward_pair.1
$region0: #{_forward_pair.1}
  #allocation0 [shape = 'u32[]', space=smem, size = 0x4, offset = 0x4, fixed_abs, tag = 'smem constant byte address 0x4 - core index']
  #allocation1 [shape = 'u32[144,128]{1,0:T(1,128)}', space=vmem, size = 0x12000, scoped, tag = 'internal scratch']
  %s0 = inlined_call_operand.vmem [shape: f32[8,32], index: 0, kind: input, shape index: {}]
  %s1 = inlined_call_operand.vmem [shape: f32[8,32], index: 1, kind: input, shape index: {}]
  %s2 = inlined_call_operand.vmem [shape: f32[32,16], index: 2, kind: input, shape index: {}]
  %s3 = inlined_call_operand.vmem [shape: f32[1,16], index: 3, kind: input, shape index: {}]
  %s4 = inlined_call_operand.hbm [shape: f32[8,16], index: 4, kind: output, shape index: {0}]
  %s5 = inlined_call_operand.hbm [shape: f32[8,16], index: 5, kind: output, shape index: {1}]
  %6 = xla_tuple %s4, %s5
  %s7 = sld [smem:[#allocation0]]
  $region34: #{_forward_pair.1} parent=0
    _
  %s9 = ssub.s32 1, %s7
  %s10 = scalar_select 0, %s9, %s7
  $region1: #{_forward_pair.1} parent=0
    #allocation2 [shape = 'u8[4096]{0}', space=vmem, size = 0x1000, scoped, tag = 'output window, operand 0, single buffered']
    #allocation3 [shape = 's32[1]{0}', space=sflag, size = 0x4, scoped, tag = 'scoped memory for _forward_pair.1']
    #allocation4 [shape = 'u8[4096]{0}', space=vmem, size = 0x1000, scoped, tag = 'output window, operand 1, single buffered']
    #allocation5 [shape = 's32[1]{0}', space=sflag, size = 0x4, scoped, tag = 'scoped memory for _forward_pair.1']
    %11 = vsyncpa [#allocation3], 0
    %12 = vsyncpa [#allocation5], 0
    // Predicated region
    $region2: #{_forward_pair.1} parent=1 // pred_check
      _
    $region3: #{_forward_pair.1} parent=1 // pred_check_branch
      %14 = sbr.rel (0) target = $region5
    $region4: #{_forward_pair.1} parent=1 // pred_region
      _
    $region5: #{_forward_pair.1} parent=1 // pred_fallthru
      _
    // Predicated region
    $region6: #{_forward_pair.1} parent=1 // pred_check
      _
    $region7: #{_forward_pair.1} parent=1 // pred_check_branch
      %16 = sbr.rel (0) target = $region9
    $region8: #{_forward_pair.1} parent=1 // pred_region
      _
    $region9: #{_forward_pair.1} parent=1 // pred_fallthru
      _
    // Predicated region
    $region10: #{_forward_pair.1} parent=1 // pred_check
      _
    $region11: #{_forward_pair.1} parent=1 // pred_check_branch
      %18 = sbr.rel (0) target = $region13
    $region12: #{_forward_pair.1} parent=1 // pred_region
      _
    $region13: #{_forward_pair.1} parent=1 // pred_fallthru
      _
    // Predicated region
    $region14: #{_forward_pair.1} parent=1 // pred_check
      _
    $region15: #{_forward_pair.1} parent=1 // pred_check_branch
      %20 = sbr.rel (0) target = $region17
    $region16: #{_forward_pair.1} parent=1 // pred_region
      _
    $region17: #{_forward_pair.1} parent=1 // pred_fallthru
      _
    %v21 = vld [vmem:[%s2] sm:$0xff]
    %v22 = vld [vmem:[%s2 + $0x8] sm:$0xff]
    %v23 = vld [vmem:[%s2 + $0x10] sm:$0xff]
    %v24 = vld [vmem:[%s2 + $0x18] sm:$0xff]
    %v25 = vld [vmem:[%s3] sm:$0x1]
    %v26 = vld [vmem:[%s0] sm:$0xff]
    %v28 = vlaneseq
    %v29 = vshrl.u32 %v28, 7
    %v30 = vsub.s32 0, %v29
    %v31 = vrot.slane %v25, %v30
    %vm33 = vcmask 261120
    %v35 = vsel %vm33, %v26, 0
    %37 = vmatprep.subr.mxu0 0.0
    %38 = vmatpush1.msra.mxu0 %v21
    %39 = vmatprep.subr.mxu0 0.0
    %40 = vmatpush1.msra.mxu0 %v22
    %41 = vmatprep.subr.mxu0 0.0
    %42 = vmatpush1.msra.mxu0 %v23
    %43 = vmatprep.subr.mxu0 0.0
    %44 = vmatpush1.msra.mxu0 %v24
    %45 = vmatprep.subr.mxu0 0.0
    %46 = vmatpush1.msra.mxu0 0.0
    %47 = vmatprep.subr.mxu0 0.0
    %48 = vmatpush1.msra.mxu0 0.0
    %49 = vmatprep.subr.mxu0 0.0
    %50 = vmatpush1.msra.mxu0 0.0
    %51 = vmatprep.subr.mxu0 0.0
    %52 = vmatpush1.msra.mxu0 0.0
    %53 = vmatprep.subr.mxu0 0.0
    %54 = vmatpush1.msra.mxu0 0.0
    %55 = vmatprep.subr.mxu0 0.0
    %56 = vmatpush1.msra.mxu0 0.0
    %57 = vmatprep.subr.mxu0 0.0
    %58 = vmatpush1.msra.mxu0 0.0
    %59 = vmatprep.subr.mxu0 0.0
    %60 = vmatpush1.msra.mxu0 0.0
    %61 = vmatprep.subr.mxu0 0.0
    %62 = vmatpush1.msra.mxu0 0.0
    %63 = vmatprep.subr.mxu0 0.0
    %64 = vmatpush1.msra.mxu0 0.0
    %65 = vmatprep.subr.mxu0 0.0
    %66 = vmatpush1.msra.mxu0 0.0
    %67 = vmatprep.subr.mxu0 0.0
    %68 = vmatpush1.msra.mxu0 0.0
    %69 = vmatprep.subr.mxu0 0.0
    %70 = vmatpush1.msra.mxu0 0.0
    %71 = vmatprep.subr.mxu0 0.0
    %72 = vmatpush1.msra.mxu0 0.0
    %73 = vmatprep.subr.mxu0 0.0
    %74 = vmatpush1.msra.mxu0 0.0
    %75 = vmatprep.subr.mxu0 0.0
    %76 = vmatpush1.msra.mxu0 0.0
    %77 = vmatprep.subr.mxu0 0.0
    %78 = vmatpush1.msra.mxu0 0.0
    %79 = vmatprep.subr.mxu0 0.0
    %80 = vmatpush1.msra.mxu0 0.0
    %81 = vmatprep.subr.mxu0 0.0
    %82 = vmatpush1.msra.mxu0 0.0
    %83 = vmatprep.subr.mxu0 0.0
    %84 = vmatpush1.msra.mxu0 0.0
    %85 = vmatprep.subr.mxu0 0.0
    %86 = vmatpush1.msra.mxu0 0.0
    %87 = vmatprep.subr.mxu0 0.0
    %88 = vmatpush1.msra.mxu0 0.0
    %89 = vmatprep.subr.mxu0 0.0
    %90 = vmatpush1.msra.mxu0 0.0
    %91 = vmatprep.subr.mxu0 0.0
    %92 = vmatpush1.msra.mxu0 0.0
    %93 = vmatprep.subr.mxu0 0.0
    %94 = vmatpush1.msra.mxu0 0.0
    %95 = vmatprep.subr.mxu0 0.0
    %96 = vmatpush1.msra.mxu0 0.0
    %97 = vmatprep.subr.mxu0 0.0
    %98 = vmatpush1.msra.mxu0 0.0
    %99 = vmatprep.subr.mxu0 0.0
    %100 = vmatpush1.msra.mxu0 0.0
    %101 = vmatprep.mubr.f32.mxu0 0.0
    %102 = vmatmul.mubr.f32.gmra.mrb[0].mxu0 %v35
    %v103 = vpop.f32.mrb[0].mxu0
    %v104 = vadd.f32 %v31, %v103
    %v105 = vpop.f32.mrb[0].mxu0
    %106 = vdwg.mxu0
    %v107 = vxor.u32 %v104, 2147483648
    %v108 = vmul.f32 %v107, 1.442695
    %v109 = vpow.pop %v108
    %v110 = vadd.f32 %v109, 1.0
    %v111 = vrcp.pop %v110
    %v112 = vmul.f32 1.0, %v111
    %vm113 = vcmask 130048
    %114 = vst.msk [vmem:[#allocation2] sm:$0xff] %vm113, %v112
    %v115 = vld [vmem:[%s1] sm:$0xff]
    %v117 = vsel %vm33, %v115, 0
    %119 = vmatprep.subr.mxu0 0.0
    %120 = vmatpush1.msra.mxu0 %v21
    %121 = vmatprep.subr.mxu0 0.0
    %122 = vmatpush1.msra.mxu0 %v22
    %123 = vmatprep.subr.mxu0 0.0
    %124 = vmatpush1.msra.mxu0 %v23
    %125 = vmatprep.subr.mxu0 0.0
    %126 = vmatpush1.msra.mxu0 %v24
    %127 = vmatprep.subr.mxu0 0.0
    %128 = vmatpush1.msra.mxu0 0.0
    %129 = vmatprep.subr.mxu0 0.0
    %130 = vmatpush1.msra.mxu0 0.0
    %131 = vmatprep.subr.mxu0 0.0
    %132 = vmatpush1.msra.mxu0 0.0
    %133 = vmatprep.subr.mxu0 0.0
    %134 = vmatpush1.msra.mxu0 0.0
    %135 = vmatprep.subr.mxu0 0.0
    %136 = vmatpush1.msra.mxu0 0.0
    %137 = vmatprep.subr.mxu0 0.0
    %138 = vmatpush1.msra.mxu0 0.0
    %139 = vmatprep.subr.mxu0 0.0
    %140 = vmatpush1.msra.mxu0 0.0
    %141 = vmatprep.subr.mxu0 0.0
    %142 = vmatpush1.msra.mxu0 0.0
    %143 = vmatprep.subr.mxu0 0.0
    %144 = vmatpush1.msra.mxu0 0.0
    %145 = vmatprep.subr.mxu0 0.0
    %146 = vmatpush1.msra.mxu0 0.0
    %147 = vmatprep.subr.mxu0 0.0
    %148 = vmatpush1.msra.mxu0 0.0
    %149 = vmatprep.subr.mxu0 0.0
    %150 = vmatpush1.msra.mxu0 0.0
    %151 = vmatprep.subr.mxu0 0.0
    %152 = vmatpush1.msra.mxu0 0.0
    %153 = vmatprep.subr.mxu0 0.0
    %154 = vmatpush1.msra.mxu0 0.0
    %155 = vmatprep.subr.mxu0 0.0
    %156 = vmatpush1.msra.mxu0 0.0
    %157 = vmatprep.subr.mxu0 0.0
    %158 = vmatpush1.msra.mxu0 0.0
    %159 = vmatprep.subr.mxu0 0.0
    %160 = vmatpush1.msra.mxu0 0.0
    %161 = vmatprep.subr.mxu0 0.0
    %162 = vmatpush1.msra.mxu0 0.0
    %163 = vmatprep.subr.mxu0 0.0
    %164 = vmatpush1.msra.mxu0 0.0
    %165 = vmatprep.subr.mxu0 0.0
    %166 = vmatpush1.msra.mxu0 0.0
    %167 = vmatprep.subr.mxu0 0.0
    %168 = vmatpush1.msra.mxu0 0.0
    %169 = vmatprep.subr.mxu0 0.0
    %170 = vmatpush1.msra.mxu0 0.0
    %171 = vmatprep.subr.mxu0 0.0
    %172 = vmatpush1.msra.mxu0 0.0
    %173 = vmatprep.subr.mxu0 0.0
    %174 = vmatpush1.msra.mxu0 0.0
    %175 = vmatprep.subr.mxu0 0.0
    %176 = vmatpush1.msra.mxu0 0.0
    %177 = vmatprep.subr.mxu0 0.0
    %178 = vmatpush1.msra.mxu0 0.0
    %179 = vmatprep.subr.mxu0 0.0
    %180 = vmatpush1.msra.mxu0 0.0
    %181 = vmatprep.subr.mxu0 0.0
    %182 = vmatpush1.msra.mxu0 0.0
    %183 = vmatprep.mubr.f32.mxu0 0.0
    %184 = vmatmul.mubr.f32.gmra.mrb[0].mxu0 %v117
    %v185 = vpop.f32.mrb[0].mxu0
    %v186 = vadd.f32 %v31, %v185
    %v187 = vpop.f32.mrb[0].mxu0
    %188 = vdwg.mxu0
    %v189 = vxor.u32 %v186, 2147483648
    %v190 = vmul.f32 %v189, 1.442695
    %v191 = vpow.pop %v190
    %v192 = vadd.f32 %v191, 1.0
    %v193 = vrcp.pop %v192
    %v194 = vmul.f32 1.0, %v193
    %195 = vst.msk [vmem:[#allocation4] sm:$0xff] %vm113, %v194
    // Predicated region
    $region18: #{_forward_pair.1} parent=1 // pred_check
      _
    $region19: #{_forward_pair.1} parent=1 // pred_check_branch
      %197 = sbr.rel (0) target = $region21
    $region20: #{_forward_pair.1} parent=1 // pred_region
      %s199 = ssub.s32 128, 128
      %200 = vsyncadd [#allocation3], %s199
      %s202 = sshll.u32 [#allocation2], 4
      %s203 = int_to_ptr.vmem [resolvable:$true] %s202
      %205 = dma.vmem_to_hbm [thread:$0]  %s203, 128, %s4, [#allocation3]
    $region21: #{_forward_pair.1} parent=1 // pred_fallthru
      _
    // Predicated region
    $region22: #{_forward_pair.1} parent=1 // pred_check
      _
    $region23: #{_forward_pair.1} parent=1 // pred_check_branch
      %207 = sbr.rel (0) target = $region25
    $region24: #{_forward_pair.1} parent=1 // pred_region
      %s209 = ssub.s32 128, 128
      %210 = vsyncadd [#allocation5], %s209
      %s212 = sshll.u32 [#allocation4], 4
      %s213 = int_to_ptr.vmem [resolvable:$true] %s212
      %215 = dma.vmem_to_hbm [thread:$0]  %s213, 128, %s5, [#allocation5]
    $region25: #{_forward_pair.1} parent=1 // pred_fallthru
      _
    // Predicated region
    $region26: #{_forward_pair.1} parent=1 // pred_check
      _
    $region27: #{_forward_pair.1} parent=1 // pred_check_branch
      %217 = sbr.rel (0) target = $region29
    $region28: #{_forward_pair.1} parent=1 // pred_region
      %218 = dma.done [#allocation3], 128
    $region29: #{_forward_pair.1} parent=1 // pred_fallthru
      _
    // Predicated region
    $region30: #{_forward_pair.1} parent=1 // pred_check
      _
    $region31: #{_forward_pair.1} parent=1 // pred_check_branch
      %220 = sbr.rel (0) target = $region33
    $region32: #{_forward_pair.1} parent=1 // pred_region
      %221 = dma.done [#allocation5], 128
    $region33: #{_forward_pair.1} parent=1 // pred_fallthru
      _
    %222 = vsyncpa [#allocation3], 1
    %223 = vsyncpa [#allocation5], 1

</llo_original>
